<compile_context>
chip_gen: v7x
topology: tpu7x:2x2x1
jax: 0.10.0
libtpu: 0.0.40
codegen_flags: <defaults>
</compile_context>

<pallas_src>
import functools

import jax
import jax.numpy as jnp
from jax.experimental import pallas as pl
from jax.experimental.pallas import tpu as pltpu


# -------------------- kernels --------------------
# Block shapes: (1, C, T)  [channels on sublanes, T spatial lanes]  or
#               (1, C, tR, 128)  [small-C packed layout].
# In both layouts the reduction axis is axis=1 (channels), so the same
# kernel bodies serve both.

def _layernorm_kernel(x_ref, g_ref, o_ref, *, eps, inv_c):
    x = x_ref[...].astype(jnp.float32)
    # Single pass over x: E[x] and E[x^2] (f32 accumulation; activations are
    # small-magnitude so the E[x^2]-mean^2 cancellation risk is negligible).
    s1 = jnp.sum(x, axis=1, keepdims=True)
    s2 = jnp.sum(x * x, axis=1, keepdims=True)
    mean = s1 * inv_c
    var = jnp.maximum(s2 * inv_c - mean * mean, 0.0)   # unbiased=False
    inv = jax.lax.rsqrt(var + eps)
    g = g_ref[...].astype(jnp.float32)
    o_ref[...] = ((x - mean) * inv * g).astype(o_ref.dtype)


def _rmsnorm_kernel(x_ref, g_ref, o_ref):
    # torch: F.normalize(x, dim=1) * g * sqrt(C); sqrt(C) is folded into g on
    # the host; sqrt+divide replaced by a single rsqrt (EUP slot).
    x = x_ref[...].astype(jnp.float32)
    ssq = jnp.sum(x * x, axis=1, keepdims=True)
    # x / max(||x||, 1e-12)  ==  x * rsqrt(max(||x||^2, 1e-24))
    inv = jax.lax.rsqrt(jnp.maximum(ssq, 1e-24))
    o_ref[...] = (x * inv * g_ref[...].astype(jnp.float32)).astype(o_ref.dtype)


# -------------------- tiling policy --------------------

_MIN_GRID_STEPS = 4   # enough for DMA/compute overlap and both v7x TCs


def _target_block_bytes():
    """Per-block input bytes to aim for, by TPU generation."""
    # v7x (~3.2 TB/s HBM per TC, 64 MiB VMEM): 2 MiB blocks keep the ~0.35 us
    # per-grid-step overhead under ~15%.  v5e/v6e (0.8-1.4 TB/s, 128 MiB
    # VMEM): 1 MiB already sits at ~85% of the HBM roofline.
    try:
        vmem = pltpu.get_tpu_info().vmem_capacity_bytes
        if vmem <= (64 << 20):
            return 2 << 20
    except Exception:
        pass
    return 1 << 20


def _vmem_limit_bytes(block_elems, itemsize):
    # 2x double-buffered input + 2x output blocks + f32 temporaries + slack,
    # capped at 32 MiB (<= physical VMEM on every generation: 64 MiB v7x,
    # 128 MiB v5e/v6e).
    need = 4 * block_elems * itemsize + 4 * block_elems * 4 + (4 << 20)
    return int(min(32 << 20, max(need, 16 << 20)))


def _pick_tile(total, granule, target_elems, outer_steps, min_steps=_MIN_GRID_STEPS):
    """Tile `total` along one axis (lanes: granule=128, sublane-rows: 8).

    The tile must be a multiple of `granule` or equal to `total`.  Partial
    trailing tiles are safe (masked stores; the channel reduce never crosses
    this axis).  Returns (tile, num_tiles).
    """
    t_max = max(granule, (target_elems // granule) * granule)
    if total <= t_max:
        # A single full-extent tile per outer step is fine unless it would
        # starve the pipeline (too few total grid steps) and splitting is
        # legal / worthwhile.
        if outer_steps >= min_steps or total % granule != 0 or total < 2 * granule:
            return total, 1
        want = min(-(-min_steps // outer_steps), total // granule)
        t = max(granule, ((total // want) // granule) * granule)
        return t, pl.cdiv(total, t)
    # total > t_max: prefer an exact divisor (no masked trailing tile) but
    # only if it stays >= t_max/2 -- collapsing to tiny tiles (e.g. 128 lanes
    # for awkward factors of S) costs ~3x more than one masked partial block.
    stop = max(granule, t_max // 2) - 1
    for t in range(t_max, stop, -granule):
        if total % t == 0:
            return t, total // t
    return t_max, pl.cdiv(total, t_max)


# -------------------- pallas_call wrapper --------------------

def _norm_channels(kernel, x_ncs, g_col):
    """x_ncs: (N, C, S); g_col: (1, C, 1). Normalize over the channel axis."""
    N, C, S = x_ncs.shape
    itemsize = jnp.dtype(x_ncs.dtype).itemsize
    target_elems = max(1, _target_block_bytes() // max(C * itemsize, 1))
    sublane_pack = 8 * (4 // itemsize)        # 8 f32, 16 bf16, 32 int8

    use_packed = (C % sublane_pack != 0) and (S % 128 == 0) and (S >= 128)

    if use_packed:
        # Small-C layout: (N, C, R, 128) with R = S // 128.  Every vreg is a
        # full (8, 128) tile of spatial positions; channels live on a
        # cross-vreg axis so the reduce is pure VPU adds.
        R = S // 128
        tR, n_s = _pick_tile(R, 8, max(1, target_elems // 128), N)
        block_elems = C * tR * 128
        out = pl.pallas_call(
            kernel,
            out_shape=jax.ShapeDtypeStruct((N, C, R, 128), x_ncs.dtype),
            grid_spec=pltpu.PrefetchScalarGridSpec(
                num_scalar_prefetch=0,
                grid=(N, n_s),
                in_specs=[
                    pl.BlockSpec((1, C, tR, 128), lambda n, s: (n, 0, s, 0)),
                    # tiny g, constant index_map -> fetched once, not per step
                    pl.BlockSpec((1, C, 1, 1), lambda n, s: (0, 0, 0, 0)),
                ],
                out_specs=pl.BlockSpec((1, C, tR, 128),
                                       lambda n, s: (n, 0, s, 0)),
            ),
            compiler_params=pltpu.CompilerParams(
                dimension_semantics=("parallel", "parallel"),
                vmem_limit_bytes=_vmem_limit_bytes(block_elems, itemsize)),
        )(x_ncs.reshape(N, C, R, 128), g_col.reshape(1, C, 1, 1))
        return out.reshape(N, C, S)

    # Standard layout: channels on sublanes, S on lanes.
    t, n_s = _pick_tile(S, 128, target_elems, N)
    block_elems = C * t
    return pl.pallas_call(
        kernel,
        out_shape=jax.ShapeDtypeStruct((N, C, S), x_ncs.dtype),
        grid_spec=pltpu.PrefetchScalarGridSpec(
            num_scalar_prefetch=0,
            grid=(N, n_s),
            in_specs=[
                pl.BlockSpec((1, C, t), lambda n, s: (n, 0, s)),
                pl.BlockSpec((1, C, 1), lambda n, s: (0, 0, 0)),
            ],
            out_specs=pl.BlockSpec((1, C, t), lambda n, s: (n, 0, s)),
        ),
        compiler_params=pltpu.CompilerParams(
            dimension_semantics=("parallel", "parallel"),
            vmem_limit_bytes=_vmem_limit_bytes(block_elems, itemsize)),
    )(x_ncs, g_col)


# -------------------- norm wrappers --------------------

def layer_norm_2d(x_nchw, g):
    """x: (N, C, H, W), g: (1, C, 1, 1). Normalizes over the channel dim."""
    N, C, H, W = x_nchw.shape
    eps = 1e-5 if x_nchw.dtype == jnp.float32 else 1e-3
    y = _norm_channels(
        functools.partial(_layernorm_kernel, eps=eps, inv_c=1.0 / C),
        x_nchw.reshape(N, C, H * W),            # free reshape, no transpose
        g.reshape(1, C, 1),
    )
    return y.reshape(N, C, H, W)


def rms_norm_1d(x_ncl, g):
    """x: (N, C, L), g: (1, C, 1). F.normalize(x, dim=1) * g * sqrt(C)."""
    N, C, L = x_ncl.shape
    g_scaled = (g.reshape(1, C, 1) * (float(C) ** 0.5)).astype(jnp.float32)
    return _norm_channels(_rmsnorm_kernel, x_ncl, g_scaled)


# -------------------- PreNorm module --------------------

class PreNorm:
    def __init__(self, dim, fn=lambda x: x, conv_2d=False):
        self.fn = fn
        self.conv_2d = conv_2d
        if conv_2d:
            self.g = jnp.ones((1, dim, 1, 1), dtype=jnp.float32)  # LayerNorm.g
        else:
            self.g = jnp.ones((1, dim, 1), dtype=jnp.float32)     # RMSNorm.g

    def __call__(self, x):
        if self.conv_2d:
            x = layer_norm_2d(x, self.g)
        else:
            x = rms_norm_1d(x, self.g)
        return self.fn(x)


# -------------------- reference (pure JAX) --------------------

def _layer_norm_2d_ref(x, g):
    eps = 1e-5 if x.dtype == jnp.float32 else 1e-3
    mean = jnp.mean(x, axis=1, keepdims=True)
    var = jnp.mean((x - mean) ** 2, axis=1, keepdims=True)
    return (x - mean) * jax.lax.rsqrt(var + eps) * g


def _rms_norm_1d_ref(x, g):
    norm = jnp.sqrt(jnp.sum(x * x, axis=1, keepdims=True))
    return x / jnp.maximum(norm, 1e-12) * g * (x.shape[1] ** 0.5)


# -------------------- main --------------------

if __name__ == "__main__":
    key = jax.random.PRNGKey(0)
    k1, k2 = jax.random.split(key)

    dim = 4

    # conv_2d=True path: NCHW input (exercises the small-C packed layout).
    x2d = jax.random.normal(k1, (2, dim, 16, 16), dtype=jnp.float32)
    pre2d = PreNorm(dim, fn=lambda x: x, conv_2d=True)
    y2d = jax.block_until_ready(pre2d(x2d))
    ref2d = _layer_norm_2d_ref(x2d, pre2d.g)
    assert jnp.allclose(y2d, ref2d, atol=1e-4, rtol=1e-4), "LayerNorm mismatch"

    # conv_2d=False path: NCL input (exercises the small-S full-extent path).
    x1d = jax.random.normal(k2, (2, dim, 8), dtype=jnp.float32)
    pre1d = PreNorm(dim, fn=lambda x: x, conv_2d=False)
    y1d = jax.block_until_ready(pre1d(x1d))
    ref1d = _rms_norm_1d_ref(x1d, pre1d.g)
    assert jnp.allclose(y1d, ref1d, atol=1e-4, rtol=1e-4), "RMSNorm mismatch"

    print("KERNEL_OK")
</pallas_src>

<mosaic_0001>
module attributes {stable_mosaic.version = 11 : i64} {
  func.func @_layernorm_kernel(%arg0: i32, %arg1: i32, %arg2: memref<1x4x2x128xf32, #tpu.memory_space<vmem>>, %arg3: memref<1x4x1x1xf32, #tpu.memory_space<vmem>>, %arg4: memref<1x4x2x128xf32, #tpu.memory_space<vmem>>) attributes {dimension_semantics = [#tpu.dimension_semantics<parallel>, #tpu.dimension_semantics<parallel>], iteration_bounds = array<i64: 2, 1>, scalar_prefetch = 0 : i64, scratch_operands = 0 : i64, tpu.core_type = #tpu.core_type<tc>, window_params = [{transform_indices = @transform_0, window_bounds = array<i64: 1, 4, 2, 128>}, {pipeline_mode = #tpu.pipeline_mode<synchronous>, transform_indices = @transform_1, window_bounds = array<i64: 1, 4, 1, 1>}, {transform_indices = @transform_2, window_bounds = array<i64: 1, 4, 2, 128>}]} {
    %c0 = arith.constant 0 : index
    %c0_0 = arith.constant 0 : index
    %c0_1 = arith.constant 0 : index
    %c0_2 = arith.constant 0 : index
    %0 = vector.load %arg2[%c0, %c0_0, %c0_1, %c0_2] : memref<1x4x2x128xf32, #tpu.memory_space<vmem>>, vector<1x4x2x128xf32>
    %cst = arith.constant dense<0.000000e+00> : vector<1x2x128xf32>
    %1 = vector.multi_reduction <add>, %0, %cst [1] : vector<1x4x2x128xf32> to vector<1x2x128xf32>
    %2 = vector.shape_cast %1 : vector<1x2x128xf32> to vector<1x1x2x128xf32>
    %3 = arith.mulf %0, %0 : vector<1x4x2x128xf32>
    %cst_3 = arith.constant dense<0.000000e+00> : vector<1x2x128xf32>
    %4 = vector.multi_reduction <add>, %3, %cst_3 [1] : vector<1x4x2x128xf32> to vector<1x2x128xf32>
    %5 = vector.shape_cast %4 : vector<1x2x128xf32> to vector<1x1x2x128xf32>
    %cst_4 = arith.constant 2.500000e-01 : f32
    %6 = vector.broadcast %cst_4 : f32 to vector<1x1x2x128xf32>
    %7 = arith.mulf %2, %6 : vector<1x1x2x128xf32>
    %cst_5 = arith.constant 2.500000e-01 : f32
    %8 = vector.broadcast %cst_5 : f32 to vector<1x1x2x128xf32>
    %9 = arith.mulf %5, %8 : vector<1x1x2x128xf32>
    %10 = arith.mulf %7, %7 : vector<1x1x2x128xf32>
    %11 = arith.subf %9, %10 : vector<1x1x2x128xf32>
    %cst_6 = arith.constant 0.000000e+00 : f32
    %12 = vector.broadcast %cst_6 : f32 to vector<1x1x2x128xf32>
    %13 = arith.maximumf %11, %12 : vector<1x1x2x128xf32>
    %cst_7 = arith.constant 9.99999974E-6 : f32
    %14 = vector.broadcast %cst_7 : f32 to vector<1x1x2x128xf32>
    %15 = arith.addf %13, %14 : vector<1x1x2x128xf32>
    %16 = math.rsqrt %15 : vector<1x1x2x128xf32>
    %c0_8 = arith.constant 0 : index
    %c0_9 = arith.constant 0 : index
    %c0_10 = arith.constant 0 : index
    %c0_11 = arith.constant 0 : index
    %17 = vector.load %arg3[%c0_8, %c0_9, %c0_10, %c0_11] : memref<1x4x1x1xf32, #tpu.memory_space<vmem>>, vector<1x4x1x1xf32>
    %18 = vector.broadcast %7 : vector<1x1x2x128xf32> to vector<1x4x2x128xf32>
    %19 = arith.subf %0, %18 : vector<1x4x2x128xf32>
    %20 = vector.broadcast %16 : vector<1x1x2x128xf32> to vector<1x4x2x128xf32>
    %21 = arith.mulf %19, %20 : vector<1x4x2x128xf32>
    %22 = vector.broadcast %17 : vector<1x4x1x1xf32> to vector<1x4x2x128xf32>
    %23 = arith.mulf %21, %22 : vector<1x4x2x128xf32>
    %c0_12 = arith.constant 0 : index
    %c0_13 = arith.constant 0 : index
    %c0_14 = arith.constant 0 : index
    %c0_15 = arith.constant 0 : index
    %24 = vector.load %arg4[%c0_12, %c0_13, %c0_14, %c0_15] : memref<1x4x2x128xf32, #tpu.memory_space<vmem>>, vector<1x4x2x128xf32>
    tpu.vector_store %arg4[%c0_12, %c0_13, %c0_14, %c0_15], %23 {strides = array<i32>} : memref<1x4x2x128xf32, #tpu.memory_space<vmem>>, vector<1x4x2x128xf32>,
    return
  }
  func.func @transform_0(%arg0: i32, %arg1: i32) -> (i32, i32, i32, i32) {
    %c0_i32 = arith.constant 0 : i32
    %c0_i32_0 = arith.constant 0 : i32
    %c0_i32_1 = arith.constant 0 : i32
    return %arg0, %c0_i32, %arg1, %c0_i32_0 : i32, i32, i32, i32
  }
  func.func @transform_1(%arg0: i32, %arg1: i32) -> (i32, i32, i32, i32) {
    %c0_i32 = arith.constant 0 : i32
    %c0_i32_0 = arith.constant 0 : i32
    %c0_i32_1 = arith.constant 0 : i32
    %c0_i32_2 = arith.constant 0 : i32
    %c0_i32_3 = arith.constant 0 : i32
    return %c0_i32, %c0_i32_0, %c0_i32_1, %c0_i32_2 : i32, i32, i32, i32
  }
  func.func @transform_2(%arg0: i32, %arg1: i32) -> (i32, i32, i32, i32) {
    %c0_i32 = arith.constant 0 : i32
    %c0_i32_0 = arith.constant 0 : i32
    %c0_i32_1 = arith.constant 0 : i32
    return %arg0, %c0_i32, %arg1, %c0_i32_0 : i32, i32, i32, i32
  }
}

</mosaic_0001>

<llo_original>
// kernel: tpu_custom_call.1
$region0: #{tpu_custom_call.1}
  #allocation0 [shape = 'u32[]', space=smem, size = 0x4, offset = 0x4, fixed_abs, tag = 'smem constant byte address 0x4 - core index']
  #allocation1 [shape = 'u32[144,128]{1,0:T(1,128)}', space=vmem, size = 0x12000, scoped, tag = 'internal scratch']
  %s0 = inlined_call_operand.hbm [shape: f32[2,4,2,128], index: 0, kind: input, shape index: {}]
  %s1 = inlined_call_operand.vmem [shape: f32[1,4,1,1], index: 1, kind: input, shape index: {}]
  %s2 = inlined_call_operand.hbm [shape: f32[2,4,2,128], index: 2, kind: output, shape index: {}]
  %s3 = sld [smem:[#allocation0]]
  $region45: #{tpu_custom_call.1} parent=0
    _
  %s5 = ssub.s32 1, %s3
  %s6 = scalar_select 0, %s5, %s3
  $region1: #{tpu_custom_call.1} parent=0
    #allocation2 [shape = 'u8[8192]{0}', space=vmem, size = 0x2000, scoped, tag = 'input window, operand 0']
    #allocation3 [shape = 's32[2]{0}', space=sflag, size = 0x8, scoped, tag = 'scoped memory for tpu_custom_call.1']
    #allocation4 [shape = 's32[2]{0}', space=sflag, size = 0x8, scoped, tag = 'scoped memory for tpu_custom_call.1']
    #allocation5 [shape = 'u8[8192]{0}', space=vmem, size = 0x2000, scoped, tag = 'output window, operand 0']
    %7 = vsyncpa [#allocation3], 0
    %s8 = scalar_lea.sflag [#allocation3], 1
    %9 = vsyncpa %s8, 0
    %10 = vsyncpa [#allocation4], 0
    %s11 = scalar_lea.sflag [#allocation4], 1
    %12 = vsyncpa %s11, 0
    loop: start=0, step=1, limit=4
    $region2: #{tpu_custom_call.1} parent=1 // loop_pre_header
      _
    $region3: #{tpu_custom_call.1} parent=1 // loop_header
      %s14 = sphi 0, %s18
      %p15 = scmp.ge.s32.totalorder %s14, 4
      %s21 = sphi 0, %s33
      %s22 = sphi 0, %s29
      %s23 = sphi 0, %s21
      %s24 = sphi 0, %s22
      %s25 = sphi 0, %s23
      %s26 = sphi 0, %s24
      %s38 = sphi 0, %s40
      %s41 = sphi 0, %s38
      %s42 = sphi 0, %s41
      %s58 = sphi 0, %s42
      %s62 = sphi 0, %s62
      %s64 = sphi 0, %s62
      %s65 = sphi 0, %s64
      %s79 = sphi 0, %s65
      %s87 = sphi 0, %s89
      %s90 = sphi 0, %s87
      %s91 = sphi 0, %s90
      %s107 = sphi 0, %s91
    $region4: #{tpu_custom_call.1} parent=1 // loop_header_branch
      %17 = sbr.rel (%p15) target = $region8
    $region5: #{tpu_custom_call.1} parent=1 // loop_body
      %s19 = ssub.s32 %s14, 1
      %s20 = ssub.s32 %s14, 2
      %s27 = sadd.s32 1, %s22
      %p28 = scmp.ge.s32.totalorder %s27, 1
      %s29 = scalar_select %p28, 0, %s27
      %s30 = sadd.s32 1, %s21
      %s31 = scalar_select %p28, %s30, %s21
      %p32 = scmp.ge.s32.totalorder %s31, 2
      %s33 = scalar_select %p32, 0, %s31
      %s34 = ssub.s32 %s21, %s33
      %s35 = ssub.s32 %s22, %s29
      %s36 = sor.u32 %s34, %s35
      %p37 = scmp.eq.s32.totalorder %s36, 0
      %s39 = sadd.s32 %s38, 1
      %s40 = scalar_select %p37, %s38, %s39
      %p43 = pneg %p37
      %p44 = scmp.eq.s32.totalorder %s14, 1
      %p45 = por %p43, %p44
      %p46 = scmp.ne.s32.totalorder %s38, %s41
      %p47 = scmp.eq.s32.totalorder %s14, 0
      %p48 = por %p46, %p47
      %p49 = scmp.ne.s32.totalorder %s38, %s41
      %p50 = scmp.eq.s32.totalorder %s19, 1
      %p51 = por %p49, %p50
      %p52 = scmp.ne.s32.totalorder %s41, %s42
      %p53 = scmp.eq.s32.totalorder %s19, 0
      %p54 = por %p52, %p53
      %p55 = scmp.ne.s32.totalorder %s41, %s42
      %p56 = scmp.eq.s32.totalorder %s20, 1
      %p57 = por %p55, %p56
      %p59 = scmp.ne.s32.totalorder %s42, %s58
      %p60 = scmp.eq.s32.totalorder %s20, 0
      %p61 = por %p59, %p60
      %s63 = sadd.s32 %s62, 1
      %p66 = scmp.eq.s32.totalorder %s14, 1
      %p67 = scmp.ne.s32.totalorder %s62, %s64
      %p68 = scmp.eq.s32.totalorder %s14, 0
      %p69 = por %p67, %p68
      %p70 = scmp.ne.s32.totalorder %s62, %s64
      %p71 = scmp.eq.s32.totalorder %s19, 1
      %p72 = por %p70, %p71
      %p73 = scmp.ne.s32.totalorder %s64, %s65
      %p74 = scmp.eq.s32.totalorder %s19, 0
      %p75 = por %p73, %p74
      %p76 = scmp.ne.s32.totalorder %s64, %s65
      %p77 = scmp.eq.s32.totalorder %s20, 1
      %p78 = por %p76, %p77
      %p80 = scmp.ne.s32.totalorder %s65, %s79
      %p81 = scmp.eq.s32.totalorder %s20, 0
      %p82 = por %p80, %p81
      %s83 = ssub.s32 %s21, %s33
      %s84 = ssub.s32 %s22, %s29
      %s85 = sor.u32 %s83, %s84
      %p86 = scmp.eq.s32.totalorder %s85, 0
      %s88 = sadd.s32 %s87, 1
      %s89 = scalar_select %p86, %s87, %s88
      %p92 = pneg %p86
      %p93 = scmp.eq.s32.totalorder %s14, 1
      %p94 = por %p92, %p93
      %p95 = scmp.ne.s32.totalorder %s87, %s90
      %p96 = scmp.eq.s32.totalorder %s14, 0
      %p97 = por %p95, %p96
      %p98 = scmp.ne.s32.totalorder %s87, %s90
      %p99 = scmp.eq.s32.totalorder %s19, 1
      %p100 = por %p98, %p99
      %p101 = scmp.ne.s32.totalorder %s90, %s91
      %p102 = scmp.eq.s32.totalorder %s19, 0
      %p103 = por %p101, %p102
      %p104 = scmp.ne.s32.totalorder %s90, %s91
      %p105 = scmp.eq.s32.totalorder %s20, 1
      %p106 = por %p104, %p105
      %p108 = scmp.ne.s32.totalorder %s91, %s107
      %p109 = scmp.eq.s32.totalorder %s20, 0
      %p110 = por %p108, %p109
      %p111 = scmp.le.s32.totalorder 1, %s14
      %p112 = scmp.lt.s32.totalorder %s14, 3
      %p113 = pnand %p111, %p112
      %p114 = pneg %p113
      // Predicated region
      $region9: #{tpu_custom_call.1} parent=5 // pred_check
        _
      $region10: #{tpu_custom_call.1} parent=5 // pred_check_branch
        %116 = sbr.rel (%p113) target = $region12
      $region11: #{tpu_custom_call.1} parent=5 // pred_region
        %s117 = ssub.s32 %s14, 1
        // Predicated region
        $region13: #{tpu_custom_call.1} parent=11 // pred_check
          %p118 = pneg %p75
        $region14: #{tpu_custom_call.1} parent=11 // pred_check_branch
          %120 = sbr.rel (%p118) target = $region16
        $region15: #{tpu_custom_call.1} parent=11 // pred_region
          _
        $region16: #{tpu_custom_call.1} parent=11 // pred_fallthru
          _
      $region12: #{tpu_custom_call.1} parent=5 // pred_fallthru
        _
      %p121 = scmp.lt.s32.totalorder %s14, 2
      // Predicated region
      $region17: #{tpu_custom_call.1} parent=5 // pred_check
        %p122 = pneg %p121
      $region18: #{tpu_custom_call.1} parent=5 // pred_check_branch
        %124 = sbr.rel (%p122) target = $region20
      $region19: #{tpu_custom_call.1} parent=5 // pred_region
        // Predicated region
        $region21: #{tpu_custom_call.1} parent=19 // pred_check
          %p125 = pneg %p48
        $region22: #{tpu_custom_call.1} parent=19 // pred_check_branch
          %127 = sbr.rel (%p125) target = $region24
        $region23: #{tpu_custom_call.1} parent=19 // pred_region
          %s128 = sand.u32 %s38, 1
          %s129 = scalar_lea.sflag [#allocation3], %s128
          %s130 = sand.u32 %s38, 1
          %s131 = smul.addr %s130, 8
          %s132 = scalar_lea.vmem [#allocation2], %s131
          %s134 = ssub.s32 128, 128
          %135 = vsyncadd %s129, %s134
          %s136 = smul.addr %s21, 4
          %s137 = sadd.s32 %s22, %s136
          %s138 = smul.addr %s137, 32
          %s139 = scalar_lea.hbm %s0, %s138
          %s140 = sshll.u32 %s132, 4
          %s141 = int_to_ptr.vmem [resolvable:$true] %s140
          %146 = dma.hbm_to_vmem [thread:$0]  %s139, 128, %s141, %s129, 32, 32, 2
        $region24: #{tpu_custom_call.1} parent=19 // pred_fallthru
          _
      $region20: #{tpu_custom_call.1} parent=5 // pred_fallthru
        _
      %p147 = scmp.le.s32.totalorder 1, %s14
      %p148 = scmp.lt.s32.totalorder %s14, 3
      %p149 = pnand %p147, %p148
      %p150 = pneg %p149
      // Predicated region
      $region25: #{tpu_custom_call.1} parent=5 // pred_check
        _
      $region26: #{tpu_custom_call.1} parent=5 // pred_check_branch
        %152 = sbr.rel (%p149) target = $region28
      $region27: #{tpu_custom_call.1} parent=5 // pred_region
        %s153 = ssub.s32 %s14, 1
        %s154 = sand.u32 %s41, 1
        %s155 = scalar_lea.sflag [#allocation3], %s154
        %s156 = sand.u32 %s41, 1
        %s157 = smul.addr %s156, 8
        %s158 = scalar_lea.vmem [#allocation2], %s157
        // Predicated region
        $region29: #{tpu_custom_call.1} parent=27 // pred_check
          %p159 = pneg %p54
        $region30: #{tpu_custom_call.1} parent=27 // pred_check_branch
          %161 = sbr.rel (%p159) target = $region32
        $region31: #{tpu_custom_call.1} parent=27 // pred_region
          %162 = dma.done %s155, 128
        $region32: #{tpu_custom_call.1} parent=27 // pred_fallthru
          _
        %s163 = sand.u32 %s41, 1
        %s164 = scalar_lea.sflag [#allocation3], %s163
        %s165 = sand.u32 %s41, 1
        %s166 = smul.addr %s165, 8
        %s167 = scalar_lea.vmem [#allocation2], %s166
        %p168 = pneg %p54
        %p169 = pneg %p51
        %p170 = pneg %p75
        %p171 = pneg %p72
        %p172 = pneg %p103
        %p173 = pneg %p100
        %s174 = sand.u32 %s90, 1
        %s175 = scalar_lea.sflag [#allocation4], %s174
        %s176 = sand.u32 %s90, 1
        %s177 = smul.addr %s176, 8
        %s178 = scalar_lea.vmem [#allocation5], %s177
        %v179 = vld [vmem:[%s158] sm:$0x3]
        %v180 = vld [vmem:[%s158 + $0x2] sm:$0x3]
        %v181 = vld [vmem:[%s158 + $0x4] sm:$0x3]
        %v182 = vld [vmem:[%s158 + $0x6] sm:$0x3]
        %vm183 = vcmask 1041408
        %v184 = vsel %vm183, %v179, 0.0
        %v185 = vsel %vm183, %v180, 0.0
        %v186 = vadd.f32 %v184, %v185
        %v187 = vsel %vm183, %v181, 0.0
        %v188 = vadd.f32 %v186, %v187
        %v189 = vsel %vm183, %v182, 0.0
        %v190 = vadd.f32 %v188, %v189
        %v191 = vmul.f32 %v179, %v179
        %v192 = vmul.f32 %v180, %v180
        %v193 = vmul.f32 %v181, %v181
        %v194 = vmul.f32 %v182, %v182
        %v195 = vsel %vm183, %v191, 0.0
        %v196 = vsel %vm183, %v192, 0.0
        %v197 = vadd.f32 %v195, %v196
        %v198 = vsel %vm183, %v193, 0.0
        %v199 = vadd.f32 %v197, %v198
        %v200 = vsel %vm183, %v194, 0.0
        %v201 = vadd.f32 %v199, %v200
        %v202 = vmul.f32 %v190, 0.25
        %v203 = vmul.f32 %v201, 0.25
        %v204 = vmul.f32 %v202, %v202
        %v205 = vsub.f32 %v203, %v204
        %v206 = vmax.f32 %v205, 0.0
        %v207 = vadd.f32 %v206, 1e-05
        %v208 = vrsqrt.pop %v207
        %v209 = vld [vmem:[%s1] sm:$0x1]
        %v210 = vld [vmem:[%s1 + $0x1] sm:$0x1]
        %v211 = vld [vmem:[%s1 + $0x2] sm:$0x1]
        %v212 = vld [vmem:[%s1 + $0x3] sm:$0x1]
        %v213 = vsub.f32 %v179, %v202
        %v214 = vsub.f32 %v180, %v202
        %v215 = vsub.f32 %v181, %v202
        %v216 = vsub.f32 %v182, %v202
        %v217 = vmul.f32 %v213, %v208
        %v218 = vmul.f32 %v214, %v208
        %v219 = vmul.f32 %v215, %v208
        %v220 = vmul.f32 %v216, %v208
        %v225 = vlaneseq
        %v226 = vshrl.u32 %v225, 7
        %v227 = vsub.s32 0, %v226
        %v228 = vrot.slane %v209, %v227
        %v229 = vlaneseq
        %v230 = vshrl.u32 %v229, 7
        %v231 = vsub.s32 0, %v230
        %v232 = vrot.slane %v210, %v231
        %v233 = vlaneseq
        %v234 = vshrl.u32 %v233, 7
        %v235 = vsub.s32 0, %v234
        %v236 = vrot.slane %v211, %v235
        %v237 = vlaneseq
        %v238 = vshrl.u32 %v237, 7
        %v239 = vsub.s32 0, %v238
        %v240 = vrot.slane %v212, %v239
        %241 = vset.pattern.permute.xlu0 0
        %242 = vperm.xlu0 %241, %v228
        %v243 = vpop.permute.xlu0 %242
        %245 = vset.pattern.permute.xlu0 0
        %246 = vperm.xlu0 %245, %v232
        %v247 = vpop.permute.xlu0 %246
        %249 = vset.pattern.permute.xlu0 0
        %250 = vperm.xlu0 %249, %v236
        %v251 = vpop.permute.xlu0 %250
        %253 = vset.pattern.permute.xlu0 0
        %254 = vperm.xlu0 %253, %v240
        %v255 = vpop.permute.xlu0 %254
        %v257 = vmul.f32 %v217, %v243
        %v258 = vmul.f32 %v218, %v247
        %v259 = vmul.f32 %v219, %v251
        %v260 = vmul.f32 %v220, %v255
        %261 = vst [vmem:[%s178] sm:$0x3] %v257
        %262 = vst [vmem:[%s178 + $0x2] sm:$0x3] %v258
        %263 = vst [vmem:[%s178 + $0x4] sm:$0x3] %v259
        %264 = vst [vmem:[%s178 + $0x6] sm:$0x3] %v260
        %s265 = sand.u32 %s90, 1
        %s266 = scalar_lea.sflag [#allocation4], %s265
        %s267 = sand.u32 %s90, 1
        %s268 = smul.addr %s267, 8
        %s269 = scalar_lea.vmem [#allocation5], %s268
        // Predicated region
        $region33: #{tpu_custom_call.1} parent=27 // pred_check
          %p270 = pneg %p100
        $region34: #{tpu_custom_call.1} parent=27 // pred_check_branch
          %272 = sbr.rel (%p270) target = $region36
        $region35: #{tpu_custom_call.1} parent=27 // pred_region
          %s274 = ssub.s32 128, 128
          %275 = vsyncadd %s266, %s274
          %s276 = smul.addr %s23, 4
          %s277 = sadd.s32 %s24, %s276
          %s278 = smul.addr %s277, 32
          %s279 = scalar_lea.hbm %s2, %s278
          %s280 = sshll.u32 %s269, 4
          %s281 = int_to_ptr.vmem [resolvable:$true] %s280
          %286 = dma.vmem_to_hbm [thread:$0]  %s281, 128, %s279, %s266, 32, 32, 2
        $region36: #{tpu_custom_call.1} parent=27 // pred_fallthru
          _
      $region28: #{tpu_custom_call.1} parent=5 // pred_fallthru
        _
      %p287 = scmp.le.s32.totalorder 2, %s14
      // Predicated region
      $region37: #{tpu_custom_call.1} parent=5 // pred_check
        %p288 = pneg %p287
      $region38: #{tpu_custom_call.1} parent=5 // pred_check_branch
        %290 = sbr.rel (%p288) target = $region40
      $region39: #{tpu_custom_call.1} parent=5 // pred_region
        %s291 = ssub.s32 %s14, 2
        // Predicated region
        $region41: #{tpu_custom_call.1} parent=39 // pred_check
          %p292 = pneg %p106
        $region42: #{tpu_custom_call.1} parent=39 // pred_check_branch
          %294 = sbr.rel (%p292) target = $region44
        $region43: #{tpu_custom_call.1} parent=39 // pred_region
          %s295 = sand.u32 %s91, 1
          %s296 = scalar_lea.sflag [#allocation4], %s295
          %s297 = sand.u32 %s91, 1
          %s298 = smul.addr %s297, 8
          %s299 = scalar_lea.vmem [#allocation5], %s298
          %300 = dma.done %s296, 128
        $region44: #{tpu_custom_call.1} parent=39 // pred_fallthru
          _
      $region40: #{tpu_custom_call.1} parent=5 // pred_fallthru
        _
    $region6: #{tpu_custom_call.1} parent=1 // loop_footer
      %s18 = sadd.s32 1, %s14
    $region7: #{tpu_custom_call.1} parent=1 // loop_footer_branch
      %13 = sbr.rel target = $region3
    $region8: #{tpu_custom_call.1} parent=1 // loop_exit
      _
    %301 = vsyncpa [#allocation3], 1
    %s302 = scalar_lea.sflag [#allocation3], 1
    %303 = vsyncpa %s302, 1
    %304 = vsyncpa [#allocation4], 1
    %s305 = scalar_lea.sflag [#allocation4], 1
    %306 = vsyncpa %s305, 1

</llo_original>
